<compile_context>
chip_gen: v7x
topology: tpu7x:2x2x1
jax: 0.10.0
libtpu: 0.0.40
codegen_flags: <defaults>
</compile_context>

<pallas_src>
import functools

import jax
import jax.numpy as jnp
from jax.experimental import pallas as pl
from jax.experimental.pallas import tpu as pltpu


def _round_up(x, m):
    return (x + m - 1) // m * m


def _dnn3_kernel(x_ref, p_ref, out_ref, *, kp, lane):
    """Merged 3-branch MLP forward: exactly three lane-dense matmuls.

    x_ref   : (bm, kp)                   concat [x1|x2|x3], zero-padded
    p_ref   : (kp + 2*lane + 8, lane)    [W1 ; W2 ; W3 ; bias block]
    out_ref : (bm, lane)                 lane-dense output slab
    """
    x = x_ref[...]

    # Static, sublane/lane-aligned slices of the single packed parameter slab.
    w1 = p_ref[0:kp, :]                                 # (kp,   lane) block-diag fc11/fc21/fc31
    w2 = p_ref[kp:kp + lane, :]                         # (lane, lane) block-diag fc12/fc22/fc32
    w3 = p_ref[kp + lane:kp + 2 * lane, :]              # (lane, lane) fc3 (zero padded)
    bb = p_ref[kp + 2 * lane:kp + 2 * lane + 8, :]      # (8,    lane) rows 0/1/2 = b1/b2/b3

    # fc{11,21,31} -> relu -> (dropout = identity)
    h = jnp.dot(x, w1, preferred_element_type=jnp.float32)
    h = jnp.maximum(h + bb[0], 0.0)
    # fc{12,22,32} -> relu -> (dropout = identity)
    h = jnp.dot(h, w2, preferred_element_type=jnp.float32)
    h = jnp.maximum(h + bb[1], 0.0)
    # fc3 over the (implicit) concatenation of the three branch outputs.
    o = jnp.dot(h, w3, preferred_element_type=jnp.float32)
    out_ref[...] = (o + bb[2]).astype(out_ref.dtype)


def pack_params(params, input_sizes, hidden_size, num_classes, dtype=jnp.float32):
    """Pack PyTorch-layout (out,in) weights into one block-diagonal slab.

    Returns (slab, kp, lane) where
      slab : (kp + 2*lane + 8, lane)  rows = [W1 ; W2 ; W3 ; biases(8 rows)]
    """
    i1, i2, i3 = input_sizes
    h = hidden_size
    k = i1 + i2 + i3
    kp = _round_up(k, 8)                                  # sublane-aligned row offsets
    lane = _round_up(max(3 * h, num_classes), 128)        # lane-dense hidden/output width

    # Layer-1 block-diagonal weight (in, out) layout.
    w1 = jnp.zeros((kp, lane), dtype)
    w1 = w1.at[0:i1, 0:h].set(params["w11"].T)
    w1 = w1.at[i1:i1 + i2, h:2 * h].set(params["w21"].T)
    w1 = w1.at[i1 + i2:k, 2 * h:3 * h].set(params["w31"].T)

    # Layer-2 block-diagonal weight.
    w2 = jnp.zeros((lane, lane), dtype)
    w2 = w2.at[0:h, 0:h].set(params["w12"].T)
    w2 = w2.at[h:2 * h, h:2 * h].set(params["w22"].T)
    w2 = w2.at[2 * h:3 * h, 2 * h:3 * h].set(params["w32"].T)

    # fc3 weight over the concatenated branch outputs, zero-padded to lane.
    w3 = jnp.zeros((lane, lane), dtype)
    w3 = w3.at[0:3 * h, 0:num_classes].set(params["w3"].T)

    # Biases packed into an 8-row (sublane-aligned) block.
    bb = jnp.zeros((8, lane), dtype)
    bb = bb.at[0, 0:h].set(params["b11"])
    bb = bb.at[0, h:2 * h].set(params["b21"])
    bb = bb.at[0, 2 * h:3 * h].set(params["b31"])
    bb = bb.at[1, 0:h].set(params["b12"])
    bb = bb.at[1, h:2 * h].set(params["b22"])
    bb = bb.at[1, 2 * h:3 * h].set(params["b32"])
    bb = bb.at[2, 0:num_classes].set(params["b3"])

    slab = jnp.concatenate([w1, w2, w3, bb], axis=0)
    return slab, kp, lane


def dnn_net_three_forward(x1, x2, x3, slab, *, kp, lane, num_classes,
                          block_b=128):
    """Eval-mode DNNNetThree forward via one fused Pallas kernel."""
    b = x1.shape[0]
    x = jnp.concatenate([x1, x2, x3], axis=1).astype(jnp.float32)  # (B, K)
    k = x.shape[1]

    bp = _round_up(b, 8)
    bm = min(block_b, bp)
    bp = _round_up(bp, bm)
    x = jnp.pad(x, ((0, bp - b), (0, kp - k)))                      # (bp, kp)

    n_rows = kp + 2 * lane + 8
    kernel = functools.partial(_dnn3_kernel, kp=kp, lane=lane)

    out = pl.pallas_call(
        kernel,
        out_shape=jax.ShapeDtypeStruct((bp, lane), jnp.float32),
        grid=(bp // bm,),
        in_specs=[
            pl.BlockSpec((bm, kp), lambda i: (i, 0)),       # batch-tiled input
            pl.BlockSpec((n_rows, lane), lambda i: (0, 0)),  # resident param slab
        ],
        out_specs=pl.BlockSpec((bm, lane), lambda i: (i, 0)),
        compiler_params=pltpu.CompilerParams(
            dimension_semantics=("parallel",)),
    )(x, slab)

    return out[:b, :num_classes]


def init_params(key, input_size1, input_size2, input_size3, hidden_size,
                num_classes):
    """PyTorch-style init; weights stored PyTorch-layout (out, in)."""
    layer_dims = {
        "11": (input_size1, hidden_size), "12": (hidden_size, hidden_size),
        "21": (input_size2, hidden_size), "22": (hidden_size, hidden_size),
        "31": (input_size3, hidden_size), "32": (hidden_size, hidden_size),
        "3": (3 * hidden_size, num_classes),
    }
    params = {}
    for name, (fan_in, fan_out) in layer_dims.items():
        key, kw, kb = jax.random.split(key, 3)
        bound = 1.0 / jnp.sqrt(float(fan_in))
        params[f"w{name}"] = jax.random.uniform(
            kw, (fan_out, fan_in), jnp.float32, -bound, bound)
        params[f"b{name}"] = jax.random.uniform(
            kb, (fan_out,), jnp.float32, -bound, bound)
    return params


def reference_forward(x1, x2, x3, params):
    """Pure-JAX reference of DNNNetThree (eval-mode dropout)."""
    def branch(x, wa, ba, wb, bb):
        h = jnp.maximum(x @ wa.T + ba, 0.0)
        h = jnp.maximum(h @ wb.T + bb, 0.0)
        return h

    o1 = branch(x1, params["w11"], params["b11"], params["w12"], params["b12"])
    o2 = branch(x2, params["w21"], params["b21"], params["w22"], params["b22"])
    o3 = branch(x3, params["w31"], params["b31"], params["w32"], params["b32"])
    cat = jnp.concatenate([o1, o2, o3], axis=1)
    return cat @ params["w3"].T + params["b3"]


if __name__ == "__main__":
    B = 8
    INPUT_SIZE1, INPUT_SIZE2, INPUT_SIZE3 = 32, 24, 40
    HIDDEN = 32
    NUM_CLASSES = 8

    key = jax.random.PRNGKey(0)
    key, k1, k2, k3 = jax.random.split(key, 4)
    x1 = jax.random.normal(k1, (B, INPUT_SIZE1), jnp.float32)
    x2 = jax.random.normal(k2, (B, INPUT_SIZE2), jnp.float32)
    x3 = jax.random.normal(k3, (B, INPUT_SIZE3), jnp.float32)

    params = init_params(key, INPUT_SIZE1, INPUT_SIZE2, INPUT_SIZE3,
                         HIDDEN, NUM_CLASSES)
    slab, kp, lane = pack_params(
        params, (INPUT_SIZE1, INPUT_SIZE2, INPUT_SIZE3), HIDDEN, NUM_CLASSES)

    out = dnn_net_three_forward(x1, x2, x3, slab, kp=kp, lane=lane,
                                num_classes=NUM_CLASSES)
    out = jax.block_until_ready(out)

    ref = reference_forward(x1, x2, x3, params)
    assert out.shape == (B, NUM_CLASSES)
    assert jnp.allclose(out, ref, atol=1e-4, rtol=1e-4), "mismatch vs reference"

    print("KERNEL_OK")
</pallas_src>

<mosaic_0001>
module attributes {stable_mosaic.version = 11 : i64} {
  func.func @_dnn3_kernel(%arg0: i32, %arg1: memref<8x96xf32, #tpu.memory_space<vmem>>, %arg2: memref<360x128xf32, #tpu.memory_space<vmem>>, %arg3: memref<8x128xf32, #tpu.memory_space<vmem>>) attributes {dimension_semantics = [#tpu.dimension_semantics<parallel>], iteration_bounds = array<i64: 1>, scalar_prefetch = 0 : i64, scratch_operands = 0 : i64, tpu.core_type = #tpu.core_type<tc>, window_params = [{transform_indices = @transform_0, window_bounds = array<i64: 8, 96>}, {pipeline_mode = #tpu.pipeline_mode<synchronous>, transform_indices = @transform_1, window_bounds = array<i64: 360, 128>}, {transform_indices = @transform_2, window_bounds = array<i64: 8, 128>}]} {
    %c0 = arith.constant 0 : index
    %c0_0 = arith.constant 0 : index
    %0 = vector.load %arg1[%c0, %c0_0] : memref<8x96xf32, #tpu.memory_space<vmem>>, vector<8x96xf32>
    %c0_1 = arith.constant 0 : index
    %c0_2 = arith.constant 0 : index
    %1 = vector.load %arg2[%c0_1, %c0_2] : memref<360x128xf32, #tpu.memory_space<vmem>>, vector<96x128xf32>
    %c96 = arith.constant 96 : index
    %c0_3 = arith.constant 0 : index
    %2 = vector.load %arg2[%c96, %c0_3] : memref<360x128xf32, #tpu.memory_space<vmem>>, vector<128x128xf32>
    %c224 = arith.constant 224 : index
    %c0_4 = arith.constant 0 : index
    %3 = vector.load %arg2[%c224, %c0_4] : memref<360x128xf32, #tpu.memory_space<vmem>>, vector<128x128xf32>
    %c352 = arith.constant 352 : index
    %c0_5 = arith.constant 0 : index
    %4 = vector.load %arg2[%c352, %c0_5] : memref<360x128xf32, #tpu.memory_space<vmem>>, vector<8x128xf32>
    %cst = arith.constant dense<0.000000e+00> : vector<8x128xf32>
    %5 = tpu.matmul %0, %1, %cst {dimension_numbers = #tpu.dot_dimension_numbers<[1], [0], [0], [1], [0, 0, 1, 1], [], []>} : vector<8x96xf32>, vector<96x128xf32>, vector<8x128xf32> -> vector<8x128xf32>
    %6 = vector.extract_strided_slice %4 {offsets = [0, 0], sizes = [1, 128], strides = [1, 1]} : vector<8x128xf32> to vector<1x128xf32>
    %7 = vector.shape_cast %6 : vector<1x128xf32> to vector<128xf32>
    %8 = vector.shape_cast %7 : vector<128xf32> to vector<1x128xf32>
    %9 = vector.broadcast %8 : vector<1x128xf32> to vector<8x128xf32>
    %10 = arith.addf %5, %9 : vector<8x128xf32>
    %cst_6 = arith.constant 0.000000e+00 : f32
    %11 = vector.broadcast %cst_6 : f32 to vector<8x128xf32>
    %12 = arith.maximumf %10, %11 : vector<8x128xf32>
    %cst_7 = arith.constant dense<0.000000e+00> : vector<8x128xf32>
    %13 = tpu.matmul %12, %2, %cst_7 {dimension_numbers = #tpu.dot_dimension_numbers<[1], [0], [0], [1], [0, 0, 1, 1], [], []>} : vector<8x128xf32>, vector<128x128xf32>, vector<8x128xf32> -> vector<8x128xf32>
    %14 = vector.extract_strided_slice %4 {offsets = [1, 0], sizes = [1, 128], strides = [1, 1]} : vector<8x128xf32> to vector<1x128xf32>
    %15 = vector.shape_cast %14 : vector<1x128xf32> to vector<128xf32>
    %16 = vector.shape_cast %15 : vector<128xf32> to vector<1x128xf32>
    %17 = vector.broadcast %16 : vector<1x128xf32> to vector<8x128xf32>
    %18 = arith.addf %13, %17 : vector<8x128xf32>
    %cst_8 = arith.constant 0.000000e+00 : f32
    %19 = vector.broadcast %cst_8 : f32 to vector<8x128xf32>
    %20 = arith.maximumf %18, %19 : vector<8x128xf32>
    %cst_9 = arith.constant dense<0.000000e+00> : vector<8x128xf32>
    %21 = tpu.matmul %20, %3, %cst_9 {dimension_numbers = #tpu.dot_dimension_numbers<[1], [0], [0], [1], [0, 0, 1, 1], [], []>} : vector<8x128xf32>, vector<128x128xf32>, vector<8x128xf32> -> vector<8x128xf32>
    %22 = vector.extract_strided_slice %4 {offsets = [2, 0], sizes = [1, 128], strides = [1, 1]} : vector<8x128xf32> to vector<1x128xf32>
    %23 = vector.shape_cast %22 : vector<1x128xf32> to vector<128xf32>
    %24 = vector.shape_cast %23 : vector<128xf32> to vector<1x128xf32>
    %25 = vector.broadcast %24 : vector<1x128xf32> to vector<8x128xf32>
    %26 = arith.addf %21, %25 : vector<8x128xf32>
    %c0_10 = arith.constant 0 : index
    %c0_11 = arith.constant 0 : index
    %27 = vector.load %arg3[%c0_10, %c0_11] : memref<8x128xf32, #tpu.memory_space<vmem>>, vector<8x128xf32>
    tpu.vector_store %arg3[%c0_10, %c0_11], %26 {strides = array<i32>} : memref<8x128xf32, #tpu.memory_space<vmem>>, vector<8x128xf32>,
    return
  }
  func.func @transform_0(%arg0: i32) -> (i32, i32) {
    %c0_i32 = arith.constant 0 : i32
    %c0_i32_0 = arith.constant 0 : i32
    return %arg0, %c0_i32 : i32, i32
  }
  func.func @transform_1(%arg0: i32) -> (i32, i32) {
    %c0_i32 = arith.constant 0 : i32
    %c0_i32_0 = arith.constant 0 : i32
    %c0_i32_1 = arith.constant 0 : i32
    return %c0_i32, %c0_i32_0 : i32, i32
  }
  func.func @transform_2(%arg0: i32) -> (i32, i32) {
    %c0_i32 = arith.constant 0 : i32
    %c0_i32_0 = arith.constant 0 : i32
    return %arg0, %c0_i32 : i32, i32
  }
}

</mosaic_0001>

<llo_original>
// kernel: tpu_custom_call.1
$region0: #{tpu_custom_call.1}
  #allocation0 [shape = 'u32[]', space=smem, size = 0x4, offset = 0x4, fixed_abs, tag = 'smem constant byte address 0x4 - core index']
  #allocation1 [shape = 'u32[144,128]{1,0:T(1,128)}', space=vmem, size = 0x12000, scoped, tag = 'internal scratch']
  %s0 = inlined_call_operand.hbm [shape: f32[8,96], index: 0, kind: input, shape index: {}]
  %s1 = inlined_call_operand.hbm [shape: f32[360,128], index: 1, kind: input, shape index: {}]
  %s2 = inlined_call_operand.hbm [shape: f32[8,128], index: 2, kind: output, shape index: {}]
  %s3 = sld [smem:[#allocation0]]
  $region26: #{tpu_custom_call.1} parent=0
    _
  %s5 = ssub.s32 1, %s3
  %s6 = scalar_select 0, %s5, %s3
  $region1: #{tpu_custom_call.1} parent=0
    #allocation2 [shape = 'u8[4096]{0}', space=vmem, size = 0x1000, scoped, tag = 'input window, operand 0, single buffered']
    #allocation3 [shape = 's32[1]{0}', space=sflag, size = 0x4, scoped, tag = 'scoped memory for tpu_custom_call.1']
    #allocation4 [shape = 's32[1]{0}', space=sflag, size = 0x4, scoped, tag = 'scoped memory for tpu_custom_call.1']
    #allocation5 [shape = 'u8[184320]{0}', space=vmem, size = 0x2d000, scoped, tag = 'input window, operand 1, single buffered']
    #allocation6 [shape = 's32[1]{0}', space=sflag, size = 0x4, scoped, tag = 'scoped memory for tpu_custom_call.1']
    #allocation7 [shape = 'u8[4096]{0}', space=vmem, size = 0x1000, scoped, tag = 'output window, operand 0, single buffered']
    %7 = vsyncpa [#allocation3], 0
    %8 = vsyncpa [#allocation6], 0
    %9 = vsyncpa [#allocation4], 0
    // Predicated region
    $region2: #{tpu_custom_call.1} parent=1 // pred_check
      _
    $region3: #{tpu_custom_call.1} parent=1 // pred_check_branch
      %11 = sbr.rel (0) target = $region5
    $region4: #{tpu_custom_call.1} parent=1 // pred_region
      %s13 = ssub.s32 128, 128
      %14 = vsyncadd [#allocation3], %s13
      %s16 = sshll.u32 [#allocation2], 4
      %s17 = int_to_ptr.vmem [resolvable:$true] %s16
      %19 = dma.hbm_to_vmem [thread:$0]  %s0, 128, %s17, [#allocation3]
    $region5: #{tpu_custom_call.1} parent=1 // pred_fallthru
      _
    // Predicated region
    $region6: #{tpu_custom_call.1} parent=1 // pred_check
      _
    $region7: #{tpu_custom_call.1} parent=1 // pred_check_branch
      %21 = sbr.rel (0) target = $region9
    $region8: #{tpu_custom_call.1} parent=1 // pred_region
      %s23 = ssub.s32 5760, 5760
      %24 = vsyncadd [#allocation6], %s23
      %s25 = sshll.u32 [#allocation5], 4
      %s26 = int_to_ptr.vmem [resolvable:$true] %s25
      %31 = dma.hbm_to_vmem [thread:$0]  %s1, 5760, %s26, [#allocation6], 128, 128, 8
    $region9: #{tpu_custom_call.1} parent=1 // pred_fallthru
      _
    // Predicated region
    $region10: #{tpu_custom_call.1} parent=1 // pred_check
      _
    $region11: #{tpu_custom_call.1} parent=1 // pred_check_branch
      %33 = sbr.rel (0) target = $region13
    $region12: #{tpu_custom_call.1} parent=1 // pred_region
      %34 = dma.done [#allocation3], 128
    $region13: #{tpu_custom_call.1} parent=1 // pred_fallthru
      _
    // Predicated region
    $region14: #{tpu_custom_call.1} parent=1 // pred_check
      _
    $region15: #{tpu_custom_call.1} parent=1 // pred_check_branch
      %36 = sbr.rel (0) target = $region17
    $region16: #{tpu_custom_call.1} parent=1 // pred_region
      %37 = dma.done [#allocation6], 5760
    $region17: #{tpu_custom_call.1} parent=1 // pred_fallthru
      _
    %v38 = vld [vmem:[#allocation2] sm:$0xff]
    %v39 = vld [vmem:[#allocation5] sm:$0xff]
    %v40 = vld [vmem:[#allocation5 + $0x8] sm:$0xff]
    %v41 = vld [vmem:[#allocation5 + $0x10] sm:$0xff]
    %v42 = vld [vmem:[#allocation5 + $0x18] sm:$0xff]
    %v43 = vld [vmem:[#allocation5 + $0x20] sm:$0xff]
    %v44 = vld [vmem:[#allocation5 + $0x28] sm:$0xff]
    %v45 = vld [vmem:[#allocation5 + $0x30] sm:$0xff]
    %v46 = vld [vmem:[#allocation5 + $0x38] sm:$0xff]
    %v47 = vld [vmem:[#allocation5 + $0x40] sm:$0xff]
    %v48 = vld [vmem:[#allocation5 + $0x48] sm:$0xff]
    %v49 = vld [vmem:[#allocation5 + $0x50] sm:$0xff]
    %v50 = vld [vmem:[#allocation5 + $0x58] sm:$0xff]
    %v51 = vld [vmem:[#allocation5 + $0x60] sm:$0xff]
    %v52 = vld [vmem:[#allocation5 + $0x68] sm:$0xff]
    %v53 = vld [vmem:[#allocation5 + $0x70] sm:$0xff]
    %v54 = vld [vmem:[#allocation5 + $0x78] sm:$0xff]
    %v55 = vld [vmem:[#allocation5 + $0x80] sm:$0xff]
    %v56 = vld [vmem:[#allocation5 + $0x88] sm:$0xff]
    %v57 = vld [vmem:[#allocation5 + $0x90] sm:$0xff]
    %v58 = vld [vmem:[#allocation5 + $0x98] sm:$0xff]
    %v59 = vld [vmem:[#allocation5 + $0xa0] sm:$0xff]
    %v60 = vld [vmem:[#allocation5 + $0xa8] sm:$0xff]
    %v61 = vld [vmem:[#allocation5 + $0xb0] sm:$0xff]
    %v62 = vld [vmem:[#allocation5 + $0xb8] sm:$0xff]
    %v63 = vld [vmem:[#allocation5 + $0xc0] sm:$0xff]
    %v64 = vld [vmem:[#allocation5 + $0xc8] sm:$0xff]
    %v65 = vld [vmem:[#allocation5 + $0xd0] sm:$0xff]
    %v66 = vld [vmem:[#allocation5 + $0xd8] sm:$0xff]
    %v67 = vld [vmem:[#allocation5 + $0xe0] sm:$0xff]
    %v68 = vld [vmem:[#allocation5 + $0xe8] sm:$0xff]
    %v69 = vld [vmem:[#allocation5 + $0xf0] sm:$0xff]
    %v70 = vld [vmem:[#allocation5 + $0xf8] sm:$0xff]
    %v71 = vld [vmem:[#allocation5 + $0x100] sm:$0xff]
    %v72 = vld [vmem:[#allocation5 + $0x108] sm:$0xff]
    %v73 = vld [vmem:[#allocation5 + $0x110] sm:$0xff]
    %v74 = vld [vmem:[#allocation5 + $0x118] sm:$0xff]
    %v75 = vld [vmem:[#allocation5 + $0x120] sm:$0xff]
    %v76 = vld [vmem:[#allocation5 + $0x128] sm:$0xff]
    %v77 = vld [vmem:[#allocation5 + $0x130] sm:$0xff]
    %v78 = vld [vmem:[#allocation5 + $0x138] sm:$0xff]
    %v79 = vld [vmem:[#allocation5 + $0x140] sm:$0xff]
    %v80 = vld [vmem:[#allocation5 + $0x148] sm:$0xff]
    %v81 = vld [vmem:[#allocation5 + $0x150] sm:$0xff]
    %v82 = vld [vmem:[#allocation5 + $0x158] sm:$0xff]
    %v83 = vld [vmem:[#allocation5 + $0x160] sm:$0xff]
    %v84 = vlaneseq
    %v85 = vshrl.u32 %v84, 7
    %v86 = vsub.s32 0, %v85
    %v87 = vrot.slane %v83, %v86
    %vm88 = vcmask 785408
    %v90 = vsel %vm88, %v38, 0
    %92 = vmatprep.subr.mxu0 0.0
    %93 = vmatpush1.msra.mxu0 %v39
    %94 = vmatprep.subr.mxu0 0.0
    %95 = vmatpush1.msra.mxu0 %v40
    %96 = vmatprep.subr.mxu0 0.0
    %97 = vmatpush1.msra.mxu0 %v41
    %98 = vmatprep.subr.mxu0 0.0
    %99 = vmatpush1.msra.mxu0 %v42
    %100 = vmatprep.subr.mxu0 0.0
    %101 = vmatpush1.msra.mxu0 %v43
    %102 = vmatprep.subr.mxu0 0.0
    %103 = vmatpush1.msra.mxu0 %v44
    %104 = vmatprep.subr.mxu0 0.0
    %105 = vmatpush1.msra.mxu0 %v45
    %106 = vmatprep.subr.mxu0 0.0
    %107 = vmatpush1.msra.mxu0 %v46
    %108 = vmatprep.subr.mxu0 0.0
    %109 = vmatpush1.msra.mxu0 %v47
    %110 = vmatprep.subr.mxu0 0.0
    %111 = vmatpush1.msra.mxu0 %v48
    %112 = vmatprep.subr.mxu0 0.0
    %113 = vmatpush1.msra.mxu0 %v49
    %114 = vmatprep.subr.mxu0 0.0
    %115 = vmatpush1.msra.mxu0 %v50
    %116 = vmatprep.subr.mxu0 0.0
    %117 = vmatpush1.msra.mxu0 0.0
    %118 = vmatprep.subr.mxu0 0.0
    %119 = vmatpush1.msra.mxu0 0.0
    %120 = vmatprep.subr.mxu0 0.0
    %121 = vmatpush1.msra.mxu0 0.0
    %122 = vmatprep.subr.mxu0 0.0
    %123 = vmatpush1.msra.mxu0 0.0
    %124 = vmatprep.subr.mxu0 0.0
    %125 = vmatpush1.msra.mxu0 0.0
    %126 = vmatprep.subr.mxu0 0.0
    %127 = vmatpush1.msra.mxu0 0.0
    %128 = vmatprep.subr.mxu0 0.0
    %129 = vmatpush1.msra.mxu0 0.0
    %130 = vmatprep.subr.mxu0 0.0
    %131 = vmatpush1.msra.mxu0 0.0
    %132 = vmatprep.subr.mxu0 0.0
    %133 = vmatpush1.msra.mxu0 0.0
    %134 = vmatprep.subr.mxu0 0.0
    %135 = vmatpush1.msra.mxu0 0.0
    %136 = vmatprep.subr.mxu0 0.0
    %137 = vmatpush1.msra.mxu0 0.0
    %138 = vmatprep.subr.mxu0 0.0
    %139 = vmatpush1.msra.mxu0 0.0
    %140 = vmatprep.subr.mxu0 0.0
    %141 = vmatpush1.msra.mxu0 0.0
    %142 = vmatprep.subr.mxu0 0.0
    %143 = vmatpush1.msra.mxu0 0.0
    %144 = vmatprep.subr.mxu0 0.0
    %145 = vmatpush1.msra.mxu0 0.0
    %146 = vmatprep.subr.mxu0 0.0
    %147 = vmatpush1.msra.mxu0 0.0
    %148 = vmatprep.subr.mxu0 0.0
    %149 = vmatpush1.msra.mxu0 0.0
    %150 = vmatprep.subr.mxu0 0.0
    %151 = vmatpush1.msra.mxu0 0.0
    %152 = vmatprep.subr.mxu0 0.0
    %153 = vmatpush1.msra.mxu0 0.0
    %154 = vmatprep.subr.mxu0 0.0
    %155 = vmatpush1.msra.mxu0 0.0
    %156 = vmatprep.mubr.f32.mxu0 0.0
    %157 = vmatmul.mubr.f32.gmra.mrb[0].mxu0 %v90
    %v158 = vpop.f32.mrb[0].mxu0
    %v159 = vadd.f32 %v87, %v158
    %v160 = vpop.f32.mrb[0].mxu0
    %161 = vdwg.mxu0
    %v162 = vmax.f32 %v159, 0.0
    %v163 = vlaneseq
    %v164 = vshrl.u32 %v163, 7
    %v165 = vsub.s32 1, %v164
    %v166 = vrot.slane %v83, %v165
    %167 = vmatprep.subr.mxu0 0.0
    %168 = vmatpush1.msra.mxu0 %v51
    %169 = vmatprep.subr.mxu0 0.0
    %170 = vmatpush1.msra.mxu0 %v52
    %171 = vmatprep.subr.mxu0 0.0
    %172 = vmatpush1.msra.mxu0 %v53
    %173 = vmatprep.subr.mxu0 0.0
    %174 = vmatpush1.msra.mxu0 %v54
    %175 = vmatprep.subr.mxu0 0.0
    %176 = vmatpush1.msra.mxu0 %v55
    %177 = vmatprep.subr.mxu0 0.0
    %178 = vmatpush1.msra.mxu0 %v56
    %179 = vmatprep.subr.mxu0 0.0
    %180 = vmatpush1.msra.mxu0 %v57
    %181 = vmatprep.subr.mxu0 0.0
    %182 = vmatpush1.msra.mxu0 %v58
    %183 = vmatprep.subr.mxu0 0.0
    %184 = vmatpush1.msra.mxu0 %v59
    %185 = vmatprep.subr.mxu0 0.0
    %186 = vmatpush1.msra.mxu0 %v60
    %187 = vmatprep.subr.mxu0 0.0
    %188 = vmatpush1.msra.mxu0 %v61
    %189 = vmatprep.subr.mxu0 0.0
    %190 = vmatpush1.msra.mxu0 %v62
    %191 = vmatprep.subr.mxu0 0.0
    %192 = vmatpush1.msra.mxu0 %v63
    %193 = vmatprep.subr.mxu0 0.0
    %194 = vmatpush1.msra.mxu0 %v64
    %195 = vmatprep.subr.mxu0 0.0
    %196 = vmatpush1.msra.mxu0 %v65
    %197 = vmatprep.subr.mxu0 0.0
    %198 = vmatpush1.msra.mxu0 %v66
    %199 = vmatprep.subr.mxu0 0.0
    %200 = vmatpush1.msra.mxu0 0.0
    %201 = vmatprep.subr.mxu0 0.0
    %202 = vmatpush1.msra.mxu0 0.0
    %203 = vmatprep.subr.mxu0 0.0
    %204 = vmatpush1.msra.mxu0 0.0
    %205 = vmatprep.subr.mxu0 0.0
    %206 = vmatpush1.msra.mxu0 0.0
    %207 = vmatprep.subr.mxu0 0.0
    %208 = vmatpush1.msra.mxu0 0.0
    %209 = vmatprep.subr.mxu0 0.0
    %210 = vmatpush1.msra.mxu0 0.0
    %211 = vmatprep.subr.mxu0 0.0
    %212 = vmatpush1.msra.mxu0 0.0
    %213 = vmatprep.subr.mxu0 0.0
    %214 = vmatpush1.msra.mxu0 0.0
    %215 = vmatprep.subr.mxu0 0.0
    %216 = vmatpush1.msra.mxu0 0.0
    %217 = vmatprep.subr.mxu0 0.0
    %218 = vmatpush1.msra.mxu0 0.0
    %219 = vmatprep.subr.mxu0 0.0
    %220 = vmatpush1.msra.mxu0 0.0
    %221 = vmatprep.subr.mxu0 0.0
    %222 = vmatpush1.msra.mxu0 0.0
    %223 = vmatprep.subr.mxu0 0.0
    %224 = vmatpush1.msra.mxu0 0.0
    %225 = vmatprep.subr.mxu0 0.0
    %226 = vmatpush1.msra.mxu0 0.0
    %227 = vmatprep.subr.mxu0 0.0
    %228 = vmatpush1.msra.mxu0 0.0
    %229 = vmatprep.subr.mxu0 0.0
    %230 = vmatpush1.msra.mxu0 0.0
    %231 = vmatprep.mubr.f32.mxu0 0.0
    %232 = vmatmul.mubr.f32.gmra.mrb[0].mxu0 %v162
    %v233 = vpop.f32.mrb[0].mxu0
    %v234 = vadd.f32 %v166, %v233
    %v235 = vpop.f32.mrb[0].mxu0
    %236 = vdwg.mxu0
    %v237 = vmax.f32 %v234, 0.0
    %v238 = vlaneseq
    %v239 = vshrl.u32 %v238, 7
    %v240 = vsub.s32 2, %v239
    %v241 = vrot.slane %v83, %v240
    %242 = vmatprep.subr.mxu0 0.0
    %243 = vmatpush1.msra.mxu0 %v67
    %244 = vmatprep.subr.mxu0 0.0
    %245 = vmatpush1.msra.mxu0 %v68
    %246 = vmatprep.subr.mxu0 0.0
    %247 = vmatpush1.msra.mxu0 %v69
    %248 = vmatprep.subr.mxu0 0.0
    %249 = vmatpush1.msra.mxu0 %v70
    %250 = vmatprep.subr.mxu0 0.0
    %251 = vmatpush1.msra.mxu0 %v71
    %252 = vmatprep.subr.mxu0 0.0
    %253 = vmatpush1.msra.mxu0 %v72
    %254 = vmatprep.subr.mxu0 0.0
    %255 = vmatpush1.msra.mxu0 %v73
    %256 = vmatprep.subr.mxu0 0.0
    %257 = vmatpush1.msra.mxu0 %v74
    %258 = vmatprep.subr.mxu0 0.0
    %259 = vmatpush1.msra.mxu0 %v75
    %260 = vmatprep.subr.mxu0 0.0
    %261 = vmatpush1.msra.mxu0 %v76
    %262 = vmatprep.subr.mxu0 0.0
    %263 = vmatpush1.msra.mxu0 %v77
    %264 = vmatprep.subr.mxu0 0.0
    %265 = vmatpush1.msra.mxu0 %v78
    %266 = vmatprep.subr.mxu0 0.0
    %267 = vmatpush1.msra.mxu0 %v79
    %268 = vmatprep.subr.mxu0 0.0
    %269 = vmatpush1.msra.mxu0 %v80
    %270 = vmatprep.subr.mxu0 0.0
    %271 = vmatpush1.msra.mxu0 %v81
    %272 = vmatprep.subr.mxu0 0.0
    %273 = vmatpush1.msra.mxu0 %v82
    %274 = vmatprep.subr.mxu0 0.0
    %275 = vmatpush1.msra.mxu0 0.0
    %276 = vmatprep.subr.mxu0 0.0
    %277 = vmatpush1.msra.mxu0 0.0
    %278 = vmatprep.subr.mxu0 0.0
    %279 = vmatpush1.msra.mxu0 0.0
    %280 = vmatprep.subr.mxu0 0.0
    %281 = vmatpush1.msra.mxu0 0.0
    %282 = vmatprep.subr.mxu0 0.0
    %283 = vmatpush1.msra.mxu0 0.0
    %284 = vmatprep.subr.mxu0 0.0
    %285 = vmatpush1.msra.mxu0 0.0
    %286 = vmatprep.subr.mxu0 0.0
    %287 = vmatpush1.msra.mxu0 0.0
    %288 = vmatprep.subr.mxu0 0.0
    %289 = vmatpush1.msra.mxu0 0.0
    %290 = vmatprep.subr.mxu0 0.0
    %291 = vmatpush1.msra.mxu0 0.0
    %292 = vmatprep.subr.mxu0 0.0
    %293 = vmatpush1.msra.mxu0 0.0
    %294 = vmatprep.subr.mxu0 0.0
    %295 = vmatpush1.msra.mxu0 0.0
    %296 = vmatprep.subr.mxu0 0.0
    %297 = vmatpush1.msra.mxu0 0.0
    %298 = vmatprep.subr.mxu0 0.0
    %299 = vmatpush1.msra.mxu0 0.0
    %300 = vmatprep.subr.mxu0 0.0
    %301 = vmatpush1.msra.mxu0 0.0
    %302 = vmatprep.subr.mxu0 0.0
    %303 = vmatpush1.msra.mxu0 0.0
    %304 = vmatprep.subr.mxu0 0.0
    %305 = vmatpush1.msra.mxu0 0.0
    %306 = vmatprep.mubr.f32.mxu0 0.0
    %307 = vmatmul.mubr.f32.gmra.mrb[0].mxu0 %v237
    %v308 = vpop.f32.mrb[0].mxu0
    %v309 = vadd.f32 %v241, %v308
    %v310 = vpop.f32.mrb[0].mxu0
    %311 = vdwg.mxu0
    %312 = vst [vmem:[#allocation7] sm:$0xff] %v309
    // Predicated region
    $region18: #{tpu_custom_call.1} parent=1 // pred_check
      _
    $region19: #{tpu_custom_call.1} parent=1 // pred_check_branch
      %314 = sbr.rel (0) target = $region21
    $region20: #{tpu_custom_call.1} parent=1 // pred_region
      %s316 = ssub.s32 128, 128
      %317 = vsyncadd [#allocation4], %s316
      %s319 = sshll.u32 [#allocation7], 4
      %s320 = int_to_ptr.vmem [resolvable:$true] %s319
      %322 = dma.vmem_to_hbm [thread:$0]  %s320, 128, %s2, [#allocation4]
    $region21: #{tpu_custom_call.1} parent=1 // pred_fallthru
      _
    // Predicated region
    $region22: #{tpu_custom_call.1} parent=1 // pred_check
      _
    $region23: #{tpu_custom_call.1} parent=1 // pred_check_branch
      %324 = sbr.rel (0) target = $region25
    $region24: #{tpu_custom_call.1} parent=1 // pred_region
      %325 = dma.done [#allocation4], 128
    $region25: #{tpu_custom_call.1} parent=1 // pred_fallthru
      _
    %326 = vsyncpa [#allocation3], 1
    %327 = vsyncpa [#allocation6], 1
    %328 = vsyncpa [#allocation4], 1

</llo_original>
